<compile_context>
chip_gen: v7x
topology: tpu7x:2x2x1
jax: 0.10.0
libtpu: 0.0.40
codegen_flags: <defaults>
</compile_context>

<pallas_src>
import math
import functools

import jax
import jax.numpy as jnp
from jax import lax
from jax.experimental import pallas as pl
from jax.experimental.pallas import tpu as pltpu


_SQRT_2_OVER_PI = math.sqrt(2.0 / math.pi)
_INV_SQRT_2 = 1.0 / math.sqrt(2.0)


def _gelu_f32(y, approximate):
    if approximate == "tanh":
        # tanh goes to the EUP (separate bundle slot) -- cheap next to the MXU work.
        return 0.5 * y * (1.0 + jnp.tanh(_SQRT_2_OVER_PI * (y + 0.044715 * y * y * y)))
    # exact GELU (F.gelu approximate='none')
    return 0.5 * y * (1.0 + lax.erf(y * _INV_SQRT_2))


def _kernel_single_k(x_ref, w_ref, b_ref, o_ref, *, approximate):
    # Whole K fits in one block: no accumulator round-trip, fully fused epilogue.
    acc = lax.dot_general(
        x_ref[...], w_ref[...],
        dimension_numbers=(((1,), (1,)), ((), ())),   # x @ w.T on the MXU
        preferred_element_type=jnp.float32,
    )
    y = acc + b_ref[...].astype(jnp.float32)
    o_ref[...] = _gelu_f32(y, approximate).astype(o_ref.dtype)


def _kernel_multi_k(x_ref, w_ref, b_ref, o_ref, acc_ref, *, approximate):
    k = pl.program_id(2)

    @pl.when(k == 0)
    def _():
        acc_ref[...] = jnp.zeros_like(acc_ref)

    acc_ref[...] += lax.dot_general(
        x_ref[...], w_ref[...],
        dimension_numbers=(((1,), (1,)), ((), ())),   # x @ w.T on the MXU
        preferred_element_type=jnp.float32,
    )

    @pl.when(k == pl.num_programs(2) - 1)
    def _():
        y = acc_ref[...] + b_ref[...].astype(jnp.float32)
        o_ref[...] = _gelu_f32(y, approximate).astype(o_ref.dtype)


def _round_up(v, m):
    return ((v + m - 1) // m) * m


def gelu_linear(x, weight, bias, *, approximate="none", tm=256, tn=256, tk=512):
    """y = gelu(x @ weight.T + bias).

    x: (..., dim_in); weight: (dim_out, dim_in) [PyTorch layout]; bias: (dim_out,).
    """
    assert approximate in ("none", "tanh")
    orig_shape = x.shape
    dim_in = orig_shape[-1]
    dim_out, wk = weight.shape
    assert wk == dim_in and bias.shape == (dim_out,)

    x2d = x.reshape(-1, dim_in)
    M = x2d.shape[0]

    # Tile selection: full dim when it fits in one tile (no padding; a block
    # equal to the full array dim satisfies the (8,128) constraint), otherwise
    # keep the large aligned tile and zero-pad up to a multiple of it.
    tm_eff = tm if M > tm else M
    tn_eff = tn if dim_out > tn else dim_out
    tk_eff = tk if dim_in > tk else dim_in

    Mp = _round_up(M, tm_eff)
    Np = _round_up(dim_out, tn_eff)
    Kp = _round_up(dim_in, tk_eff)

    if Mp != M or Kp != dim_in:
        x2d = jnp.pad(x2d, ((0, Mp - M), (0, Kp - dim_in)))
    w = weight
    if Np != dim_out or Kp != dim_in:
        w = jnp.pad(w, ((0, Np - dim_out), (0, Kp - dim_in)))
    b2d = bias.reshape(1, dim_out)
    if Np != dim_out:
        b2d = jnp.pad(b2d, ((0, 0), (0, Np - dim_out)))

    mg, ng, kg = Mp // tm_eff, Np // tn_eff, Kp // tk_eff

    cost = pl.CostEstimate(
        flops=2 * Mp * Np * Kp,
        transcendentals=Mp * Np,
        bytes_accessed=int(
            x2d.size * x2d.dtype.itemsize
            + w.size * w.dtype.itemsize
            + b2d.size * b2d.dtype.itemsize
            + Mp * Np * x.dtype.itemsize
        ),
    )

    if kg == 1:
        kernel = functools.partial(_kernel_single_k, approximate=approximate)
        out = pl.pallas_call(
            kernel,
            out_shape=jax.ShapeDtypeStruct((Mp, Np), x.dtype),
            grid_spec=pltpu.PrefetchScalarGridSpec(
                num_scalar_prefetch=0,
                grid=(mg, ng),
                in_specs=[
                    pl.BlockSpec((tm_eff, tk_eff), lambda i, j: (i, 0)),   # x tile
                    pl.BlockSpec((tn_eff, tk_eff), lambda i, j: (j, 0)),   # weight tile (native layout)
                    pl.BlockSpec((1, tn_eff), lambda i, j: (0, j)),        # bias tile
                ],
                out_specs=pl.BlockSpec((tm_eff, tn_eff), lambda i, j: (i, j)),
            ),
            compiler_params=pltpu.CompilerParams(
                dimension_semantics=("parallel", "parallel"),
                vmem_limit_bytes=64 << 20,
            ),
            cost_estimate=cost,
        )(x2d, w, b2d)
    else:
        kernel = functools.partial(_kernel_multi_k, approximate=approximate)
        out = pl.pallas_call(
            kernel,
            out_shape=jax.ShapeDtypeStruct((Mp, Np), x.dtype),
            grid_spec=pltpu.PrefetchScalarGridSpec(
                num_scalar_prefetch=0,
                grid=(mg, ng, kg),
                in_specs=[
                    pl.BlockSpec((tm_eff, tk_eff), lambda i, j, k: (i, k)),   # x tile
                    pl.BlockSpec((tn_eff, tk_eff), lambda i, j, k: (j, k)),   # weight tile (native layout)
                    pl.BlockSpec((1, tn_eff), lambda i, j, k: (0, j)),        # bias tile
                ],
                out_specs=pl.BlockSpec((tm_eff, tn_eff), lambda i, j, k: (i, j)),
                scratch_shapes=[pltpu.VMEM((tm_eff, tn_eff), jnp.float32)],
            ),
            compiler_params=pltpu.CompilerParams(
                dimension_semantics=("parallel", "parallel", "arbitrary"),
                vmem_limit_bytes=64 << 20,
            ),
            cost_estimate=cost,
        )(x2d, w, b2d)

    if Mp != M or Np != dim_out:
        out = out[:M, :dim_out]
    return out.reshape(*orig_shape[:-1], dim_out)


if __name__ == "__main__":
    key = jax.random.PRNGKey(0)

    # --- Test 1: exact GELU, single-K fast path (dim_in fits one tile) ------
    batch, seq, dim_in, dim_out = 2, 8, 128, 256
    kx, kw, kb = jax.random.split(key, 3)
    bound = 1.0 / math.sqrt(dim_in)
    weight = jax.random.uniform(kw, (dim_out, dim_in), jnp.float32, -bound, bound)
    bias = jax.random.uniform(kb, (dim_out,), jnp.float32, -bound, bound)
    x = jax.random.normal(kx, (batch, seq, dim_in), jnp.float32)

    out = jax.block_until_ready(gelu_linear(x, weight, bias, approximate="none"))
    ref = jax.nn.gelu(x @ weight.T + bias, approximate=False)
    assert out.shape == ref.shape and out.dtype == ref.dtype
    assert jnp.allclose(out, ref, atol=1e-4, rtol=1e-4)

    # --- Test 2: tanh GELU, multi-K accumulator path (force tk < dim_in) ----
    dim_in2, dim_out2 = 256, 128
    kx2, kw2, kb2 = jax.random.split(jax.random.PRNGKey(1), 3)
    bound2 = 1.0 / math.sqrt(dim_in2)
    weight2 = jax.random.uniform(kw2, (dim_out2, dim_in2), jnp.float32, -bound2, bound2)
    bias2 = jax.random.uniform(kb2, (dim_out2,), jnp.float32, -bound2, bound2)
    x2 = jax.random.normal(kx2, (batch, seq, dim_in2), jnp.float32)

    out2 = jax.block_until_ready(
        gelu_linear(x2, weight2, bias2, approximate="tanh", tk=128)
    )
    ref2 = jax.nn.gelu(x2 @ weight2.T + bias2, approximate=True)
    assert out2.shape == ref2.shape and out2.dtype == ref2.dtype
    assert jnp.allclose(out2, ref2, atol=1e-4, rtol=1e-4)

    print("KERNEL_OK")
</pallas_src>

<mosaic_0001>
module attributes {stable_mosaic.version = 11 : i64} {
  func.func @_kernel_single_k(%arg0: i32, %arg1: i32, %arg2: memref<16x128xf32, #tpu.memory_space<vmem>>, %arg3: memref<256x128xf32, #tpu.memory_space<vmem>>, %arg4: memref<1x256xf32, #tpu.memory_space<vmem>>, %arg5: memref<16x256xf32, #tpu.memory_space<vmem>>) attributes {dimension_semantics = [#tpu.dimension_semantics<parallel>, #tpu.dimension_semantics<parallel>], iteration_bounds = array<i64: 1, 1>, scalar_prefetch = 0 : i64, scratch_operands = 0 : i64, tpu.core_type = #tpu.core_type<tc>, window_params = [{transform_indices = @transform_0, window_bounds = array<i64: 16, 128>}, {transform_indices = @transform_1, window_bounds = array<i64: 256, 128>}, {transform_indices = @transform_2, window_bounds = array<i64: 1, 256>}, {transform_indices = @transform_3, window_bounds = array<i64: 16, 256>}]} {
    %c0 = arith.constant 0 : index
    %c0_0 = arith.constant 0 : index
    %0 = vector.load %arg2[%c0, %c0_0] : memref<16x128xf32, #tpu.memory_space<vmem>>, vector<16x128xf32>
    %c0_1 = arith.constant 0 : index
    %c0_2 = arith.constant 0 : index
    %1 = vector.load %arg3[%c0_1, %c0_2] : memref<256x128xf32, #tpu.memory_space<vmem>>, vector<256x128xf32>
    %cst = arith.constant dense<0.000000e+00> : vector<16x256xf32>
    %2 = tpu.matmul %0, %1, %cst {dimension_numbers = #tpu.dot_dimension_numbers<[1], [1], [0], [0], [0, 0, 1, 0], [], []>} : vector<16x128xf32>, vector<256x128xf32>, vector<16x256xf32> -> vector<16x256xf32>
    %c0_3 = arith.constant 0 : index
    %c0_4 = arith.constant 0 : index
    %3 = vector.load %arg4[%c0_3, %c0_4] : memref<1x256xf32, #tpu.memory_space<vmem>>, vector<1x256xf32>
    %4 = vector.broadcast %3 : vector<1x256xf32> to vector<16x256xf32>
    %5 = arith.addf %2, %4 : vector<16x256xf32>
    %cst_5 = arith.constant 5.000000e-01 : f32
    %6 = vector.broadcast %cst_5 : f32 to vector<16x256xf32>
    %7 = arith.mulf %6, %5 : vector<16x256xf32>
    %cst_6 = arith.constant 0.707106769 : f32
    %8 = vector.broadcast %cst_6 : f32 to vector<16x256xf32>
    %9 = arith.mulf %5, %8 : vector<16x256xf32>
    %10 = math.erf %9 : vector<16x256xf32>
    %cst_7 = arith.constant 1.000000e+00 : f32
    %11 = vector.broadcast %cst_7 : f32 to vector<16x256xf32>
    %12 = arith.addf %11, %10 : vector<16x256xf32>
    %13 = arith.mulf %7, %12 : vector<16x256xf32>
    %c0_8 = arith.constant 0 : index
    %c0_9 = arith.constant 0 : index
    %14 = vector.load %arg5[%c0_8, %c0_9] : memref<16x256xf32, #tpu.memory_space<vmem>>, vector<16x256xf32>
    tpu.vector_store %arg5[%c0_8, %c0_9], %13 {strides = array<i32>} : memref<16x256xf32, #tpu.memory_space<vmem>>, vector<16x256xf32>,
    return
  }
  func.func @transform_0(%arg0: i32, %arg1: i32) -> (i32, i32) {
    %c0_i32 = arith.constant 0 : i32
    %c0_i32_0 = arith.constant 0 : i32
    return %arg0, %c0_i32 : i32, i32
  }
  func.func @transform_1(%arg0: i32, %arg1: i32) -> (i32, i32) {
    %c0_i32 = arith.constant 0 : i32
    %c0_i32_0 = arith.constant 0 : i32
    return %arg1, %c0_i32 : i32, i32
  }
  func.func @transform_2(%arg0: i32, %arg1: i32) -> (i32, i32) {
    %c0_i32 = arith.constant 0 : i32
    %c0_i32_0 = arith.constant 0 : i32
    return %c0_i32, %arg1 : i32, i32
  }
  func.func @transform_3(%arg0: i32, %arg1: i32) -> (i32, i32) {
    %c0_i32 = arith.constant 0 : i32
    return %arg0, %arg1 : i32, i32
  }
}

</mosaic_0001>

<llo_original>
// kernel: tpu_custom_call.1
$region0: #{tpu_custom_call.1}
  #allocation0 [shape = 'u32[]', space=smem, size = 0x4, offset = 0x4, fixed_abs, tag = 'smem constant byte address 0x4 - core index']
  #allocation1 [shape = 'u32[144,128]{1,0:T(1,128)}', space=vmem, size = 0x12000, scoped, tag = 'internal scratch']
  %s0 = inlined_call_operand.hbm [shape: f32[16,128], index: 0, kind: input, shape index: {}]
  %s1 = inlined_call_operand.hbm [shape: f32[256,128], index: 1, kind: input, shape index: {}]
  %s2 = inlined_call_operand.hbm [shape: f32[1,256], index: 2, kind: input, shape index: {}]
  %s3 = inlined_call_operand.hbm [shape: f32[16,256], index: 3, kind: output, shape index: {}]
  %s4 = sld [smem:[#allocation0]]
  $region34: #{tpu_custom_call.1} parent=0
    _
  %s6 = ssub.s32 1, %s4
  %s7 = scalar_select 0, %s6, %s4
  $region1: #{tpu_custom_call.1} parent=0
    #allocation2 [shape = 'u8[8192]{0}', space=vmem, size = 0x2000, scoped, tag = 'input window, operand 0, single buffered']
    #allocation3 [shape = 's32[1]{0}', space=sflag, size = 0x4, scoped, tag = 'scoped memory for tpu_custom_call.1']
    #allocation4 [shape = 's32[1]{0}', space=sflag, size = 0x4, scoped, tag = 'scoped memory for tpu_custom_call.1']
    #allocation5 [shape = 'u8[131072]{0}', space=vmem, size = 0x20000, scoped, tag = 'input window, operand 1, single buffered']
    #allocation6 [shape = 's32[1]{0}', space=sflag, size = 0x4, scoped, tag = 'scoped memory for tpu_custom_call.1']
    #allocation7 [shape = 'u8[1024]{0}', space=vmem, size = 0x400, scoped, tag = 'input window, operand 2, single buffered']
    #allocation8 [shape = 'u8[16384]{0}', space=vmem, size = 0x4000, scoped, tag = 'output window, operand 0, single buffered']
    %8 = vsyncpa [#allocation3], 0
    %9 = vsyncpa [#allocation6], 0
    %10 = vsyncpa [#allocation4], 0
    // Predicated region
    $region2: #{tpu_custom_call.1} parent=1 // pred_check
      _
    $region3: #{tpu_custom_call.1} parent=1 // pred_check_branch
      %12 = sbr.rel (0) target = $region5
    $region4: #{tpu_custom_call.1} parent=1 // pred_region
      %s14 = ssub.s32 256, 256
      %15 = vsyncadd [#allocation3], %s14
      %s16 = sshll.u32 [#allocation2], 4
      %s17 = int_to_ptr.vmem [resolvable:$true] %s16
      %22 = dma.hbm_to_vmem [thread:$0]  %s0, 256, %s17, [#allocation3], 128, 128, 8
    $region5: #{tpu_custom_call.1} parent=1 // pred_fallthru
      _
    // Predicated region
    $region6: #{tpu_custom_call.1} parent=1 // pred_check
      _
    $region7: #{tpu_custom_call.1} parent=1 // pred_check_branch
      %24 = sbr.rel (0) target = $region9
    $region8: #{tpu_custom_call.1} parent=1 // pred_region
      %s26 = ssub.s32 4096, 4096
      %27 = vsyncadd [#allocation6], %s26
      %s28 = sshll.u32 [#allocation5], 4
      %s29 = int_to_ptr.vmem [resolvable:$true] %s28
      %34 = dma.hbm_to_vmem [thread:$0]  %s1, 4096, %s29, [#allocation6], 128, 128, 8
    $region9: #{tpu_custom_call.1} parent=1 // pred_fallthru
      _
    // Predicated region
    $region10: #{tpu_custom_call.1} parent=1 // pred_check
      _
    $region11: #{tpu_custom_call.1} parent=1 // pred_check_branch
      %36 = sbr.rel (0) target = $region13
    $region12: #{tpu_custom_call.1} parent=1 // pred_region
      %s38 = ssub.s32 32, 32
      %39 = vsyncadd [#allocation6], %s38
      %s41 = sshll.u32 [#allocation7], 4
      %s42 = int_to_ptr.vmem [resolvable:$true] %s41
      %44 = dma.hbm_to_vmem [thread:$0]  %s2, 32, %s42, [#allocation6]
    $region13: #{tpu_custom_call.1} parent=1 // pred_fallthru
      _
    // Predicated region
    $region14: #{tpu_custom_call.1} parent=1 // pred_check
      _
    $region15: #{tpu_custom_call.1} parent=1 // pred_check_branch
      %46 = sbr.rel (0) target = $region17
    $region16: #{tpu_custom_call.1} parent=1 // pred_region
      %47 = dma.done [#allocation3], 256
    $region17: #{tpu_custom_call.1} parent=1 // pred_fallthru
      _
    // Predicated region
    $region18: #{tpu_custom_call.1} parent=1 // pred_check
      _
    $region19: #{tpu_custom_call.1} parent=1 // pred_check_branch
      %49 = sbr.rel (0) target = $region21
    $region20: #{tpu_custom_call.1} parent=1 // pred_region
      %50 = dma.done [#allocation6], 4096
    $region21: #{tpu_custom_call.1} parent=1 // pred_fallthru
      _
    // Predicated region
    $region22: #{tpu_custom_call.1} parent=1 // pred_check
      _
    $region23: #{tpu_custom_call.1} parent=1 // pred_check_branch
      %52 = sbr.rel (0) target = $region25
    $region24: #{tpu_custom_call.1} parent=1 // pred_region
      %53 = dma.done [#allocation6], 32
    $region25: #{tpu_custom_call.1} parent=1 // pred_fallthru
      _
    %v54 = vld [vmem:[#allocation2] sm:$0xff]
    %v55 = vld [vmem:[#allocation2 + $0x8] sm:$0xff]
    %v56 = vld [vmem:[#allocation5] sm:$0xff]
    %v57 = vld [vmem:[#allocation5 + $0x8] sm:$0xff]
    %v58 = vld [vmem:[#allocation5 + $0x10] sm:$0xff]
    %v59 = vld [vmem:[#allocation5 + $0x18] sm:$0xff]
    %v60 = vld [vmem:[#allocation5 + $0x20] sm:$0xff]
    %v61 = vld [vmem:[#allocation5 + $0x28] sm:$0xff]
    %v62 = vld [vmem:[#allocation5 + $0x30] sm:$0xff]
    %v63 = vld [vmem:[#allocation5 + $0x38] sm:$0xff]
    %v64 = vld [vmem:[#allocation5 + $0x40] sm:$0xff]
    %v65 = vld [vmem:[#allocation5 + $0x48] sm:$0xff]
    %v66 = vld [vmem:[#allocation5 + $0x50] sm:$0xff]
    %v67 = vld [vmem:[#allocation5 + $0x58] sm:$0xff]
    %v68 = vld [vmem:[#allocation5 + $0x60] sm:$0xff]
    %v69 = vld [vmem:[#allocation5 + $0x68] sm:$0xff]
    %v70 = vld [vmem:[#allocation5 + $0x70] sm:$0xff]
    %v71 = vld [vmem:[#allocation5 + $0x78] sm:$0xff]
    %v72 = vld [vmem:[#allocation5 + $0x80] sm:$0xff]
    %v73 = vld [vmem:[#allocation5 + $0x88] sm:$0xff]
    %v74 = vld [vmem:[#allocation5 + $0x90] sm:$0xff]
    %v75 = vld [vmem:[#allocation5 + $0x98] sm:$0xff]
    %v76 = vld [vmem:[#allocation5 + $0xa0] sm:$0xff]
    %v77 = vld [vmem:[#allocation5 + $0xa8] sm:$0xff]
    %v78 = vld [vmem:[#allocation5 + $0xb0] sm:$0xff]
    %v79 = vld [vmem:[#allocation5 + $0xb8] sm:$0xff]
    %v80 = vld [vmem:[#allocation5 + $0xc0] sm:$0xff]
    %v81 = vld [vmem:[#allocation5 + $0xc8] sm:$0xff]
    %v82 = vld [vmem:[#allocation5 + $0xd0] sm:$0xff]
    %v83 = vld [vmem:[#allocation5 + $0xd8] sm:$0xff]
    %v84 = vld [vmem:[#allocation5 + $0xe0] sm:$0xff]
    %v85 = vld [vmem:[#allocation5 + $0xe8] sm:$0xff]
    %v86 = vld [vmem:[#allocation5 + $0xf0] sm:$0xff]
    %v87 = vld [vmem:[#allocation5 + $0xf8] sm:$0xff]
    %v88 = vld [vmem:[#allocation7] sm:$0x3]
    %v90 = vlaneseq
    %v91 = vshrl.u32 %v90, 7
    %v92 = vsub.s32 0, %v91
    %v93 = vrot.slane %v88, %v92
    %v94 = vlaneseq
    %v95 = vshrl.u32 %v94, 7
    %v96 = vsub.s32 1, %v95
    %v97 = vrot.slane %v88, %v96
    %100 = vmatprep.subr.mxu0 0.0
    %101 = vmatpush1.xpose.msra.mxu0 %v56
    %102 = vmatprep.subr.mxu0 0.0
    %103 = vmatpush1.xpose.msra.mxu0 %v57
    %104 = vmatprep.subr.mxu0 0.0
    %105 = vmatpush1.xpose.msra.mxu0 %v58
    %106 = vmatprep.subr.mxu0 0.0
    %107 = vmatpush1.xpose.msra.mxu0 %v59
    %108 = vmatprep.subr.mxu0 0.0
    %109 = vmatpush1.xpose.msra.mxu0 %v60
    %110 = vmatprep.subr.mxu0 0.0
    %111 = vmatpush1.xpose.msra.mxu0 %v61
    %112 = vmatprep.subr.mxu0 0.0
    %113 = vmatpush1.xpose.msra.mxu0 %v62
    %114 = vmatprep.subr.mxu0 0.0
    %115 = vmatpush1.xpose.msra.mxu0 %v63
    %116 = vmatprep.subr.mxu0 0.0
    %117 = vmatpush1.xpose.msra.mxu0 %v64
    %118 = vmatprep.subr.mxu0 0.0
    %119 = vmatpush1.xpose.msra.mxu0 %v65
    %120 = vmatprep.subr.mxu0 0.0
    %121 = vmatpush1.xpose.msra.mxu0 %v66
    %122 = vmatprep.subr.mxu0 0.0
    %123 = vmatpush1.xpose.msra.mxu0 %v67
    %124 = vmatprep.subr.mxu0 0.0
    %125 = vmatpush1.xpose.msra.mxu0 %v68
    %126 = vmatprep.subr.mxu0 0.0
    %127 = vmatpush1.xpose.msra.mxu0 %v69
    %128 = vmatprep.subr.mxu0 0.0
    %129 = vmatpush1.xpose.msra.mxu0 %v70
    %130 = vmatprep.subr.mxu0 0.0
    %131 = vmatpush1.xpose.msra.mxu0 %v71
    %132 = vmatprep.subr.mxu0 0.0
    %133 = vmatpush1.xpose.msra.mxu0 %v72
    %134 = vmatprep.subr.mxu0 0.0
    %135 = vmatpush1.xpose.msra.mxu0 %v73
    %136 = vmatprep.subr.mxu0 0.0
    %137 = vmatpush1.xpose.msra.mxu0 %v74
    %138 = vmatprep.subr.mxu0 0.0
    %139 = vmatpush1.xpose.msra.mxu0 %v75
    %140 = vmatprep.subr.mxu0 0.0
    %141 = vmatpush1.xpose.msra.mxu0 %v76
    %142 = vmatprep.subr.mxu0 0.0
    %143 = vmatpush1.xpose.msra.mxu0 %v77
    %144 = vmatprep.subr.mxu0 0.0
    %145 = vmatpush1.xpose.msra.mxu0 %v78
    %146 = vmatprep.subr.mxu0 0.0
    %147 = vmatpush1.xpose.msra.mxu0 %v79
    %148 = vmatprep.subr.mxu0 0.0
    %149 = vmatpush1.xpose.msra.mxu0 %v80
    %150 = vmatprep.subr.mxu0 0.0
    %151 = vmatpush1.xpose.msra.mxu0 %v81
    %152 = vmatprep.subr.mxu0 0.0
    %153 = vmatpush1.xpose.msra.mxu0 %v82
    %154 = vmatprep.subr.mxu0 0.0
    %155 = vmatpush1.xpose.msra.mxu0 %v83
    %156 = vmatprep.subr.mxu0 0.0
    %157 = vmatpush1.xpose.msra.mxu0 %v84
    %158 = vmatprep.subr.mxu0 0.0
    %159 = vmatpush1.xpose.msra.mxu0 %v85
    %160 = vmatprep.subr.mxu0 0.0
    %161 = vmatpush1.xpose.msra.mxu0 %v86
    %162 = vmatprep.subr.mxu0 0.0
    %163 = vmatpush1.xpose.msra.mxu0 %v87
    %164 = vmatprep.mubr.f32.mxu0 0.0
    %165 = vmatmul.mubr.f32.gmra.mrb[0].mxu0 %v54
    %v166 = vpop.f32.mrb[0].mxu0
    %v167 = vadd.f32 %v93, %v166
    %v168 = vpop.f32.mrb[0].mxu0
    %v169 = vadd.f32 %v97, %v168
    %170 = vmatprep.mubr.f32.mxu0 0.0
    %171 = vmatmul.mubr.f32.gmra.mrb[0].mxu0 %v55
    %v172 = vpop.f32.mrb[0].mxu0
    %v173 = vadd.f32 %v93, %v172
    %v174 = vpop.f32.mrb[0].mxu0
    %v175 = vadd.f32 %v97, %v174
    %176 = vdwg.mxu0
    %v177 = vmul.f32 %v167, 0.5
    %v178 = vmul.f32 %v169, 0.5
    %v179 = vmul.f32 %v173, 0.5
    %v180 = vmul.f32 %v175, 0.5
    %v181 = vmul.f32 %v167, 0.70710677
    %v182 = vmul.f32 %v169, 0.70710677
    %v183 = vmul.f32 %v173, 0.70710677
    %v184 = vmul.f32 %v175, 0.70710677
    %v185 = verf.f32.pop %v181
    %v186 = verf.f32.pop %v182
    %v187 = verf.f32.pop %v183
    %v188 = verf.f32.pop %v184
    %v189 = vadd.f32 %v185, 1.0
    %v190 = vadd.f32 %v186, 1.0
    %v191 = vadd.f32 %v187, 1.0
    %v192 = vadd.f32 %v188, 1.0
    %v193 = vmul.f32 %v177, %v189
    %v194 = vmul.f32 %v178, %v190
    %v195 = vmul.f32 %v179, %v191
    %v196 = vmul.f32 %v180, %v192
    %197 = vst [vmem:[#allocation8] sm:$0xff] %v193
    %198 = vst [vmem:[#allocation8 + $0x8] sm:$0xff] %v194
    %199 = vst [vmem:[#allocation8 + $0x10] sm:$0xff] %v195
    %200 = vst [vmem:[#allocation8 + $0x18] sm:$0xff] %v196
    // Predicated region
    $region26: #{tpu_custom_call.1} parent=1 // pred_check
      _
    $region27: #{tpu_custom_call.1} parent=1 // pred_check_branch
      %202 = sbr.rel (0) target = $region29
    $region28: #{tpu_custom_call.1} parent=1 // pred_region
      %s204 = ssub.s32 512, 512
      %205 = vsyncadd [#allocation4], %s204
      %s206 = sshll.u32 [#allocation8], 4
      %s207 = int_to_ptr.vmem [resolvable:$true] %s206
      %212 = dma.vmem_to_hbm [thread:$0]  %s207, 512, %s3, [#allocation4], 256, 256, 16
    $region29: #{tpu_custom_call.1} parent=1 // pred_fallthru
      _
    // Predicated region
    $region30: #{tpu_custom_call.1} parent=1 // pred_check
      _
    $region31: #{tpu_custom_call.1} parent=1 // pred_check_branch
      %214 = sbr.rel (0) target = $region33
    $region32: #{tpu_custom_call.1} parent=1 // pred_region
      %215 = dma.done [#allocation4], 512
    $region33: #{tpu_custom_call.1} parent=1 // pred_fallthru
      _
    %216 = vsyncpa [#allocation3], 1
    %217 = vsyncpa [#allocation6], 1
    %218 = vsyncpa [#allocation4], 1

</llo_original>
